<compile_context>
chip_gen: v6e
topology: v6e:2x2x1
jax: 0.10.0
libtpu: 0.0.40
codegen_flags: <defaults>
</compile_context>

<pallas_src>
import functools

import jax
import jax.numpy as jnp
from jax.experimental import pallas as pl
from jax.experimental.pallas import tpu as pltpu

_LANES = 128
_BIAS_ROWS = 8  # row 0: b1, row 1: b2, row 2: b3, rest zero pad (sublane align)


def _round_up(n, m):
    return -(-n // m) * m


def _choose_tiling(B):
    """Returns (batch_tile, grid_steps); batch is padded to tile*steps."""
    if B <= 128:
        # Single-step kernel: latency already near the floor.
        return _round_up(B, 8), 1
    if B <= 1024:
        # >= 2 parallel steps so v7x's second TensorCore gets work.
        bt = _round_up(-(-B // 2), 8)
        return bt, 2
    # Large rollout batches: 512-row tiles amortize per-step overhead
    # (~85% of HBM roofline vs ~63% at 256) while staying far under VMEM.
    bt = 512
    return bt, -(-B // bt)


def _policy_kernel(x_ref, p_ref, out_ref, *, s_pad):
    """Fused actor+critic MLP.

    x_ref:   [bt, s_pad]          (state, zero-padded to a multiple of 8 cols)
    p_ref:   [s_pad + 264, 128]   packed param slab (see pack_policy_params)
    out_ref: [bt, 128]            cols [0:A)=mean, col A=value, rest zero
    """
    x = x_ref[...]

    w1 = p_ref[pl.ds(0, s_pad), :]                            # [s_pad, 128]
    w2 = p_ref[pl.ds(s_pad, _LANES), :]                       # [128, 128] blk-diag
    w3 = p_ref[pl.ds(s_pad + _LANES, _LANES), :]              # [128, 128] heads
    brows = p_ref[pl.ds(s_pad + 2 * _LANES, _BIAS_ROWS), :]   # 8-row aligned
    b1 = brows[0:1, :]
    b2 = brows[1:2, :]
    b3 = brows[2:3, :]

    # 3 matmuls total: actor + critic computed together (block-diag weights).
    h = jnp.maximum(jnp.dot(x, w1, preferred_element_type=jnp.float32) + b1, 0.0)
    h = jnp.maximum(jnp.dot(h, w2, preferred_element_type=jnp.float32) + b2, 0.0)
    y = jnp.dot(h, w3, preferred_element_type=jnp.float32) + b3
    # y cols: [0:A) = mean, col A = value, rest 0.  Single unmasked store.
    out_ref[...] = y.astype(out_ref.dtype)


def pack_policy_params(p, state_space, action_space, hidden_size):
    """Packs the Policy weights/biases into one lane-dense [R, 128] f32 slab.

    Row layout (s_pad = round_up(state_space, 8)):
      [0, s_pad)                : layer-1 weight  [S, 2H]  (actor | critic)
      [s_pad, s_pad+128)        : layer-2 weight  block-diag(w2a, w2c)
      [s_pad+128, s_pad+256)    : layer-3 weight  cols [0:A)=w3m, col A=w3c
      [s_pad+256, s_pad+264)    : row 0=b1, row 1=b2, row 2=b3 (mean|value)
    log_std is NOT packed: std does not depend on x and is computed once in
    the wrapper.
    """
    S, A, H = state_space, action_space, hidden_size
    assert 2 * H <= _LANES, "fused hidden width (2H) must fit in 128 lanes"
    assert A + 1 <= _LANES, "mean|value must fit in 128 lanes"
    s_pad = _round_up(S, 8)
    n_rows = s_pad + 2 * _LANES + _BIAS_ROWS

    P = jnp.zeros((n_rows, _LANES), jnp.float32)
    # layer 1: shared input x, actor cols [0:H), critic cols [H:2H)
    P = P.at[:S, :H].set(p["w1a"])
    P = P.at[:S, H:2 * H].set(p["w1c"])
    # layer 2: block-diagonal
    r = s_pad
    P = P.at[r:r + H, :H].set(p["w2a"])
    P = P.at[r + H:r + 2 * H, H:2 * H].set(p["w2c"])
    # layer 3: mean head -> cols [0:A), value head -> col A (contiguous slice)
    r = s_pad + _LANES
    P = P.at[r:r + H, :A].set(p["w3m"])
    P = P.at[r + H:r + 2 * H, A:A + 1].set(p["w3c"])
    # biases
    r = s_pad + 2 * _LANES
    P = P.at[r, :H].set(p["b1a"].reshape(-1))
    P = P.at[r, H:2 * H].set(p["b1c"].reshape(-1))
    P = P.at[r + 1, :H].set(p["b2a"].reshape(-1))
    P = P.at[r + 1, H:2 * H].set(p["b2c"].reshape(-1))
    P = P.at[r + 2, :A].set(p["b3m"].reshape(-1))
    P = P.at[r + 2, A].set(p["b3c"].reshape(-1)[0])
    return P


@functools.partial(jax.jit, static_argnames=("action_space", "out_dtype"))
def policy_forward(x, packed, log_std, *, action_space, out_dtype=jnp.float32):
    """Runs the Policy forward pass in one Pallas kernel.

    Returns (mean [B, A], std [1, A], value [B, 1])."""
    B, S = x.shape
    A = action_space
    s_pad = _round_up(S, 8)
    assert packed.shape == (s_pad + 2 * _LANES + _BIAS_ROWS, _LANES)

    bt, steps = _choose_tiling(B)
    B_pad = bt * steps
    if s_pad != S or B_pad != B:
        x = jnp.pad(x, ((0, B_pad - B), (0, s_pad - S)))

    kernel = functools.partial(_policy_kernel, s_pad=s_pad)
    out = pl.pallas_call(
        kernel,
        grid=(steps,),
        in_specs=[
            pl.BlockSpec((bt, s_pad), lambda i: (i, 0)),
            pl.BlockSpec(packed.shape, lambda i: (0, 0)),  # params stay resident
        ],
        out_specs=pl.BlockSpec((bt, _LANES), lambda i: (i, 0)),
        out_shape=jax.ShapeDtypeStruct((B_pad, _LANES), out_dtype),
        compiler_params=pltpu.CompilerParams(dimension_semantics=("parallel",)),
    )(x, packed)

    # One contiguous slice: mean lanes [0:A) and value at lane A.
    head = out[:B, :A + 1]
    mean = head[:, :A]
    value = head[:, A:A + 1]
    # std is x-independent; compute it once here (tiny [1, A] op).
    std = jnp.exp(jnp.clip(log_std, -2.0, 1.0)).reshape(1, A).astype(out_dtype)
    return mean, std, value


def init_policy_params(key, state_space, action_space, hidden_size=32):
    """Deterministic init mirroring Policy.init_weights: W ~ N(0, 0.1), b = 0,
    log_std = ones(action_space). Weights stored as [in, out] (transposed)."""
    ks = jax.random.split(key, 6)

    def lin(k, n_in, n_out):
        w = 0.1 * jax.random.normal(k, (n_in, n_out), dtype=jnp.float32)
        b = jnp.zeros((1, n_out), dtype=jnp.float32)
        return w, b

    w1a, b1a = lin(ks[0], state_space, hidden_size)
    w2a, b2a = lin(ks[1], hidden_size, hidden_size)
    w3m, b3m = lin(ks[2], hidden_size, action_space)
    w1c, b1c = lin(ks[3], state_space, hidden_size)
    w2c, b2c = lin(ks[4], hidden_size, hidden_size)
    w3c, b3c = lin(ks[5], hidden_size, 1)

    return {
        "w1a": w1a, "b1a": b1a, "w2a": w2a, "b2a": b2a,
        "w3m": w3m, "b3m": b3m,
        "w1c": w1c, "b1c": b1c, "w2c": w2c, "b2c": b2c,
        "w3c": w3c, "b3c": b3c,
        "log_std": jnp.ones((1, action_space), dtype=jnp.float32),
    }


def policy_forward_ref(x, p):
    """Plain-JAX reference for correctness checking."""
    h = jnp.maximum(x @ p["w1a"] + p["b1a"], 0.0)
    h = jnp.maximum(h @ p["w2a"] + p["b2a"], 0.0)
    mean = h @ p["w3m"] + p["b3m"]
    std = jnp.exp(jnp.clip(p["log_std"], -2.0, 1.0))
    c = jnp.maximum(x @ p["w1c"] + p["b1c"], 0.0)
    c = jnp.maximum(c @ p["w2c"] + p["b2c"], 0.0)
    value = c @ p["w3c"] + p["b3c"]
    return mean, std, value


if __name__ == "__main__":
    key = jax.random.PRNGKey(0)
    k_param, k_x, k_x2 = jax.random.split(key, 3)

    batch = 8
    state_space = 8
    action_space = 4
    hidden_size = 32

    raw = init_policy_params(k_param, state_space, action_space, hidden_size)
    packed = pack_policy_params(raw, state_space, action_space, hidden_size)

    # --- small batch (single grid step) ---
    x = jax.random.normal(k_x, (batch, state_space), dtype=jnp.float32)
    mean, std, value = policy_forward(x, packed, raw["log_std"],
                                      action_space=action_space)
    jax.block_until_ready((mean, std, value))

    mean_r, std_r, value_r = policy_forward_ref(x, raw)
    assert mean.shape == (batch, action_space), "bad mean shape"
    assert std.shape == (1, action_space), "bad std shape"
    assert value.shape == (batch, 1), "bad value shape"
    assert jnp.allclose(mean, mean_r, atol=1e-4, rtol=1e-4), "mean mismatch"
    assert jnp.allclose(std, std_r, atol=1e-4, rtol=1e-4), "std mismatch"
    assert jnp.allclose(value, value_r, atol=1e-4, rtol=1e-4), "value mismatch"

    # --- non-multiple batch (padded, 2 parallel grid steps) ---
    batch2 = 300
    x2 = jax.random.normal(k_x2, (batch2, state_space), dtype=jnp.float32)
    mean2, std2, value2 = policy_forward(x2, packed, raw["log_std"],
                                         action_space=action_space)
    jax.block_until_ready((mean2, std2, value2))
    mean2_r, _, value2_r = policy_forward_ref(x2, raw)
    assert mean2.shape == (batch2, action_space), "bad mean shape (tiled)"
    assert value2.shape == (batch2, 1), "bad value shape (tiled)"
    assert jnp.allclose(mean2, mean2_r, atol=1e-4, rtol=1e-4), "mean mismatch (tiled)"
    assert jnp.allclose(value2, value2_r, atol=1e-4, rtol=1e-4), "value mismatch (tiled)"

    print("KERNEL_OK")
</pallas_src>

<mosaic_0001>
module attributes {stable_mosaic.version = 11 : i64} {
  func.func @_policy_kernel(%arg0: i32, %arg1: memref<8x8xf32, #tpu.memory_space<vmem>>, %arg2: memref<272x128xf32, #tpu.memory_space<vmem>>, %arg3: memref<8x128xf32, #tpu.memory_space<vmem>>) attributes {dimension_semantics = [#tpu.dimension_semantics<parallel>], iteration_bounds = array<i64: 1>, scalar_prefetch = 0 : i64, scratch_operands = 0 : i64, tpu.core_type = #tpu.core_type<tc>, window_params = [{transform_indices = @transform_0, window_bounds = array<i64: 8, 8>}, {pipeline_mode = #tpu.pipeline_mode<synchronous>, transform_indices = @transform_1, window_bounds = array<i64: 272, 128>}, {transform_indices = @transform_2, window_bounds = array<i64: 8, 128>}]} {
    %c0 = arith.constant 0 : index
    %c0_0 = arith.constant 0 : index
    %0 = vector.load %arg1[%c0, %c0_0] : memref<8x8xf32, #tpu.memory_space<vmem>>, vector<8x8xf32>
    %c0_1 = arith.constant 0 : index
    %c0_2 = arith.constant 0 : index
    %1 = vector.load %arg2[%c0_1, %c0_2] : memref<272x128xf32, #tpu.memory_space<vmem>>, vector<8x128xf32>
    %c8 = arith.constant 8 : index
    %c0_3 = arith.constant 0 : index
    %2 = vector.load %arg2[%c8, %c0_3] : memref<272x128xf32, #tpu.memory_space<vmem>>, vector<128x128xf32>
    %c136 = arith.constant 136 : index
    %c0_4 = arith.constant 0 : index
    %3 = vector.load %arg2[%c136, %c0_4] : memref<272x128xf32, #tpu.memory_space<vmem>>, vector<128x128xf32>
    %c264 = arith.constant 264 : index
    %c0_5 = arith.constant 0 : index
    %4 = vector.load %arg2[%c264, %c0_5] : memref<272x128xf32, #tpu.memory_space<vmem>>, vector<8x128xf32>
    %5 = vector.extract_strided_slice %4 {offsets = [0, 0], sizes = [1, 128], strides = [1, 1]} : vector<8x128xf32> to vector<1x128xf32>
    %6 = vector.extract_strided_slice %4 {offsets = [1, 0], sizes = [1, 128], strides = [1, 1]} : vector<8x128xf32> to vector<1x128xf32>
    %7 = vector.extract_strided_slice %4 {offsets = [2, 0], sizes = [1, 128], strides = [1, 1]} : vector<8x128xf32> to vector<1x128xf32>
    %cst = arith.constant dense<0.000000e+00> : vector<8x128xf32>
    %8 = tpu.matmul %0, %1, %cst {dimension_numbers = #tpu.dot_dimension_numbers<[1], [0], [0], [1], [0, 0, 1, 1], [], []>} : vector<8x8xf32>, vector<8x128xf32>, vector<8x128xf32> -> vector<8x128xf32>
    %9 = vector.broadcast %5 : vector<1x128xf32> to vector<8x128xf32>
    %10 = arith.addf %8, %9 : vector<8x128xf32>
    %cst_6 = arith.constant 0.000000e+00 : f32
    %11 = vector.broadcast %cst_6 : f32 to vector<8x128xf32>
    %12 = arith.maximumf %10, %11 : vector<8x128xf32>
    %cst_7 = arith.constant dense<0.000000e+00> : vector<8x128xf32>
    %13 = tpu.matmul %12, %2, %cst_7 {dimension_numbers = #tpu.dot_dimension_numbers<[1], [0], [0], [1], [0, 0, 1, 1], [], []>} : vector<8x128xf32>, vector<128x128xf32>, vector<8x128xf32> -> vector<8x128xf32>
    %14 = vector.broadcast %6 : vector<1x128xf32> to vector<8x128xf32>
    %15 = arith.addf %13, %14 : vector<8x128xf32>
    %cst_8 = arith.constant 0.000000e+00 : f32
    %16 = vector.broadcast %cst_8 : f32 to vector<8x128xf32>
    %17 = arith.maximumf %15, %16 : vector<8x128xf32>
    %cst_9 = arith.constant dense<0.000000e+00> : vector<8x128xf32>
    %18 = tpu.matmul %17, %3, %cst_9 {dimension_numbers = #tpu.dot_dimension_numbers<[1], [0], [0], [1], [0, 0, 1, 1], [], []>} : vector<8x128xf32>, vector<128x128xf32>, vector<8x128xf32> -> vector<8x128xf32>
    %19 = vector.broadcast %7 : vector<1x128xf32> to vector<8x128xf32>
    %20 = arith.addf %18, %19 : vector<8x128xf32>
    %c0_10 = arith.constant 0 : index
    %c0_11 = arith.constant 0 : index
    %21 = vector.load %arg3[%c0_10, %c0_11] : memref<8x128xf32, #tpu.memory_space<vmem>>, vector<8x128xf32>
    tpu.vector_store %arg3[%c0_10, %c0_11], %20 {strides = array<i32>} : memref<8x128xf32, #tpu.memory_space<vmem>>, vector<8x128xf32>,
    return
  }
  func.func @transform_0(%arg0: i32) -> (i32, i32) {
    %c0_i32 = arith.constant 0 : i32
    %c0_i32_0 = arith.constant 0 : i32
    return %arg0, %c0_i32 : i32, i32
  }
  func.func @transform_1(%arg0: i32) -> (i32, i32) {
    %c0_i32 = arith.constant 0 : i32
    %c0_i32_0 = arith.constant 0 : i32
    %c0_i32_1 = arith.constant 0 : i32
    return %c0_i32, %c0_i32_0 : i32, i32
  }
  func.func @transform_2(%arg0: i32) -> (i32, i32) {
    %c0_i32 = arith.constant 0 : i32
    %c0_i32_0 = arith.constant 0 : i32
    return %arg0, %c0_i32 : i32, i32
  }
}

</mosaic_0001>

<llo_original>
// kernel: policy_forward.1
$region0: #{policy_forward.1}
  #allocation0 [shape = 'u32[]', space=smem, size = 0x4, offset = 0x4, fixed_abs, tag = 'smem constant byte address 0x4 - core index']
  #allocation1 [shape = 'u32[144,128]{1,0:T(1,128)}', space=vmem, size = 0x12000, scoped, tag = 'internal scratch']
  %s0 = inlined_call_operand.hbm [shape: f32[8,8], index: 0, kind: input, shape index: {}]
  %s1 = inlined_call_operand.hbm [shape: f32[272,128], index: 1, kind: input, shape index: {}]
  %s2 = inlined_call_operand.vmem [shape: f32[8,128], index: 2, kind: output, shape index: {}]
  %s3 = sld [smem:[#allocation0]]
  $region26: #{policy_forward.1} parent=0
    _
  %s5 = ssub.s32 1, %s3
  %s6 = scalar_select 0, %s5, %s3
  $region1: #{policy_forward.1} parent=0
    #allocation2 [shape = 'u8[4096]{0}', space=vmem, size = 0x1000, scoped, tag = 'input window, operand 0, single buffered']
    #allocation3 [shape = 's32[1]{0}', space=sflag, size = 0x4, scoped, tag = 'scoped memory for policy_forward.1']
    #allocation4 [shape = 'u8[139264]{0}', space=vmem, size = 0x22000, scoped, tag = 'input window, operand 1, single buffered']
    #allocation5 [shape = 's32[1]{0}', space=sflag, size = 0x4, scoped, tag = 'scoped memory for policy_forward.1']
    %7 = vsyncpa [#allocation3], 0
    %8 = vsyncpa [#allocation5], 0
    // Predicated region
    $region2: #{policy_forward.1} parent=1 // pred_check
      _
    $region3: #{policy_forward.1} parent=1 // pred_check_branch
      %10 = sbr.rel (0) target = $region5
    $region4: #{policy_forward.1} parent=1 // pred_region
      %s12 = ssub.s32 128, 128
      %13 = vsyncadd [#allocation3], %s12
      %s15 = sshll.u32 [#allocation2], 4
      %s16 = int_to_ptr.vmem [resolvable:$true] %s15
      %18 = dma.hbm_to_vmem [thread:$0]  %s0, 128, %s16, [#allocation3]
    $region5: #{policy_forward.1} parent=1 // pred_fallthru
      _
    // Predicated region
    $region6: #{policy_forward.1} parent=1 // pred_check
      _
    $region7: #{policy_forward.1} parent=1 // pred_check_branch
      %20 = sbr.rel (0) target = $region9
    $region8: #{policy_forward.1} parent=1 // pred_region
      %s22 = ssub.s32 4352, 4352
      %23 = vsyncadd [#allocation5], %s22
      %s24 = sshll.u32 [#allocation4], 4
      %s25 = int_to_ptr.vmem [resolvable:$true] %s24
      %30 = dma.hbm_to_vmem [thread:$0]  %s1, 4352, %s25, [#allocation5], 128, 128, 8
    $region9: #{policy_forward.1} parent=1 // pred_fallthru
      _
    // Predicated region
    $region10: #{policy_forward.1} parent=1 // pred_check
      _
    $region11: #{policy_forward.1} parent=1 // pred_check_branch
      %32 = sbr.rel (0) target = $region13
    $region12: #{policy_forward.1} parent=1 // pred_region
      %33 = dma.done [#allocation3], 128
    $region13: #{policy_forward.1} parent=1 // pred_fallthru
      _
    // Predicated region
    $region14: #{policy_forward.1} parent=1 // pred_check
      _
    $region15: #{policy_forward.1} parent=1 // pred_check_branch
      %35 = sbr.rel (0) target = $region17
    $region16: #{policy_forward.1} parent=1 // pred_region
      %36 = dma.done [#allocation5], 4352
    $region17: #{policy_forward.1} parent=1 // pred_fallthru
      _
    %v37 = vld [vmem:[#allocation2] sm:$0xff]
    %v38 = vld [vmem:[#allocation4] sm:$0xff]
    %v39 = vld [vmem:[#allocation4 + $0x8] sm:$0xff]
    %v40 = vld [vmem:[#allocation4 + $0x10] sm:$0xff]
    %v41 = vld [vmem:[#allocation4 + $0x18] sm:$0xff]
    %v42 = vld [vmem:[#allocation4 + $0x20] sm:$0xff]
    %v43 = vld [vmem:[#allocation4 + $0x28] sm:$0xff]
    %v44 = vld [vmem:[#allocation4 + $0x30] sm:$0xff]
    %v45 = vld [vmem:[#allocation4 + $0x38] sm:$0xff]
    %v46 = vld [vmem:[#allocation4 + $0x40] sm:$0xff]
    %v47 = vld [vmem:[#allocation4 + $0x48] sm:$0xff]
    %v48 = vld [vmem:[#allocation4 + $0x50] sm:$0xff]
    %v49 = vld [vmem:[#allocation4 + $0x58] sm:$0xff]
    %v50 = vld [vmem:[#allocation4 + $0x60] sm:$0xff]
    %v51 = vld [vmem:[#allocation4 + $0x68] sm:$0xff]
    %v52 = vld [vmem:[#allocation4 + $0x70] sm:$0xff]
    %v53 = vld [vmem:[#allocation4 + $0x78] sm:$0xff]
    %v54 = vld [vmem:[#allocation4 + $0x80] sm:$0xff]
    %v55 = vld [vmem:[#allocation4 + $0x88] sm:$0xff]
    %v56 = vld [vmem:[#allocation4 + $0x90] sm:$0xff]
    %v57 = vld [vmem:[#allocation4 + $0x98] sm:$0xff]
    %v58 = vld [vmem:[#allocation4 + $0xa0] sm:$0xff]
    %v59 = vld [vmem:[#allocation4 + $0xa8] sm:$0xff]
    %v60 = vld [vmem:[#allocation4 + $0xb0] sm:$0xff]
    %v61 = vld [vmem:[#allocation4 + $0xb8] sm:$0xff]
    %v62 = vld [vmem:[#allocation4 + $0xc0] sm:$0xff]
    %v63 = vld [vmem:[#allocation4 + $0xc8] sm:$0xff]
    %v64 = vld [vmem:[#allocation4 + $0xd0] sm:$0xff]
    %v65 = vld [vmem:[#allocation4 + $0xd8] sm:$0xff]
    %v66 = vld [vmem:[#allocation4 + $0xe0] sm:$0xff]
    %v67 = vld [vmem:[#allocation4 + $0xe8] sm:$0xff]
    %v68 = vld [vmem:[#allocation4 + $0xf0] sm:$0xff]
    %v69 = vld [vmem:[#allocation4 + $0xf8] sm:$0xff]
    %v70 = vld [vmem:[#allocation4 + $0x100] sm:$0xff]
    %v71 = vld [vmem:[#allocation4 + $0x108] sm:$0xff]
    %v72 = vlaneseq
    %v73 = vshrl.u32 %v72, 7
    %v74 = vsub.s32 0, %v73
    %v75 = vrot.slane %v71, %v74
    %vm76 = vcmask 64512
    %v78 = vsel %vm76, %v37, 0
    %80 = vmatprep.subr.mxu0 0.0
    %81 = vmatpush1.msra.mxu0 0.0
    %82 = vmatprep.subr.mxu0 0.0
    %83 = vmatpush1.msra.mxu0 0.0
    %84 = vmatprep.subr.mxu0 0.0
    %85 = vmatpush1.msra.mxu0 0.0
    %86 = vmatprep.subr.mxu0 0.0
    %87 = vmatpush1.msra.mxu0 0.0
    %88 = vmatprep.subr.mxu0 0.0
    %89 = vmatpush1.msra.mxu0 0.0
    %90 = vmatprep.subr.mxu0 0.0
    %91 = vmatpush1.msra.mxu0 0.0
    %92 = vmatprep.subr.mxu0 0.0
    %93 = vmatpush1.msra.mxu0 0.0
    %94 = vmatprep.subr.mxu0 0.0
    %95 = vmatpush1.msra.mxu0 0.0
    %96 = vmatprep.subr.mxu0 0.0
    %97 = vmatpush1.msra.mxu0 0.0
    %98 = vmatprep.subr.mxu0 0.0
    %99 = vmatpush1.msra.mxu0 0.0
    %100 = vmatprep.subr.mxu0 0.0
    %101 = vmatpush1.msra.mxu0 0.0
    %102 = vmatprep.subr.mxu0 0.0
    %103 = vmatpush1.msra.mxu0 0.0
    %104 = vmatprep.subr.mxu0 0.0
    %105 = vmatpush1.msra.mxu0 0.0
    %106 = vmatprep.subr.mxu0 0.0
    %107 = vmatpush1.msra.mxu0 0.0
    %108 = vmatprep.subr.mxu0 0.0
    %109 = vmatpush1.msra.mxu0 0.0
    %110 = vmatprep.subr.mxu0 0.0
    %111 = vmatpush1.msra.mxu0 %v38
    %112 = vmatprep.subr.mxu0 0.0
    %113 = vmatpush2.msra.mxu0 0.0
    %114 = vmatprep.subr.mxu0 0.0
    %115 = vmatpush2.msra.mxu0 0.0
    %116 = vmatprep.subr.mxu0 0.0
    %117 = vmatpush2.msra.mxu0 0.0
    %118 = vmatprep.subr.mxu0 0.0
    %119 = vmatpush2.msra.mxu0 0.0
    %120 = vmatprep.subr.mxu0 0.0
    %121 = vmatpush2.msra.mxu0 0.0
    %122 = vmatprep.subr.mxu0 0.0
    %123 = vmatpush2.msra.mxu0 0.0
    %124 = vmatprep.subr.mxu0 0.0
    %125 = vmatpush2.msra.mxu0 0.0
    %126 = vmatprep.subr.mxu0 0.0
    %127 = vmatpush2.msra.mxu0 0.0
    %128 = vmatprep.subr.mxu0 0.0
    %129 = vmatpush2.msra.mxu0 0.0
    %130 = vmatprep.subr.mxu0 0.0
    %131 = vmatpush2.msra.mxu0 0.0
    %132 = vmatprep.subr.mxu0 0.0
    %133 = vmatpush2.msra.mxu0 0.0
    %134 = vmatprep.subr.mxu0 0.0
    %135 = vmatpush2.msra.mxu0 0.0
    %136 = vmatprep.subr.mxu0 0.0
    %137 = vmatpush2.msra.mxu0 0.0
    %138 = vmatprep.subr.mxu0 0.0
    %139 = vmatpush2.msra.mxu0 0.0
    %140 = vmatprep.subr.mxu0 0.0
    %141 = vmatpush2.msra.mxu0 0.0
    %142 = vmatprep.subr.mxu0 0.0
    %143 = vmatpush2.msra.mxu0 0.0
    %144 = vmatprep.mubr.f32.mxu0 0.0
    %145 = vmatmul.mubr.f32.gmra.mxu0 %v78
    %v146 = vpop.f32.mrf.mxu0
    %v147 = vadd.f32 %v75, %v146
    %v148 = vpop.f32.mrf.mxu0
    %149 = vdwg.mxu0
    %v150 = vmax.f32 %v147, 0.0
    %v151 = vlaneseq
    %v152 = vshrl.u32 %v151, 7
    %v153 = vsub.s32 1, %v152
    %v154 = vrot.slane %v71, %v153
    %155 = vmatprep.subr.mxu0 0.0
    %156 = vmatpush1.msra.mxu0 %v54
    %157 = vmatprep.subr.mxu0 0.0
    %158 = vmatpush1.msra.mxu0 %v53
    %159 = vmatprep.subr.mxu0 0.0
    %160 = vmatpush1.msra.mxu0 %v52
    %161 = vmatprep.subr.mxu0 0.0
    %162 = vmatpush1.msra.mxu0 %v51
    %163 = vmatprep.subr.mxu0 0.0
    %164 = vmatpush1.msra.mxu0 %v50
    %165 = vmatprep.subr.mxu0 0.0
    %166 = vmatpush1.msra.mxu0 %v49
    %167 = vmatprep.subr.mxu0 0.0
    %168 = vmatpush1.msra.mxu0 %v48
    %169 = vmatprep.subr.mxu0 0.0
    %170 = vmatpush1.msra.mxu0 %v47
    %171 = vmatprep.subr.mxu0 0.0
    %172 = vmatpush1.msra.mxu0 %v46
    %173 = vmatprep.subr.mxu0 0.0
    %174 = vmatpush1.msra.mxu0 %v45
    %175 = vmatprep.subr.mxu0 0.0
    %176 = vmatpush1.msra.mxu0 %v44
    %177 = vmatprep.subr.mxu0 0.0
    %178 = vmatpush1.msra.mxu0 %v43
    %179 = vmatprep.subr.mxu0 0.0
    %180 = vmatpush1.msra.mxu0 %v42
    %181 = vmatprep.subr.mxu0 0.0
    %182 = vmatpush1.msra.mxu0 %v41
    %183 = vmatprep.subr.mxu0 0.0
    %184 = vmatpush1.msra.mxu0 %v40
    %185 = vmatprep.subr.mxu0 0.0
    %186 = vmatpush1.msra.mxu0 %v39
    %187 = vmatprep.subr.mxu0 0.0
    %188 = vmatpush2.msra.mxu0 0.0
    %189 = vmatprep.subr.mxu0 0.0
    %190 = vmatpush2.msra.mxu0 0.0
    %191 = vmatprep.subr.mxu0 0.0
    %192 = vmatpush2.msra.mxu0 0.0
    %193 = vmatprep.subr.mxu0 0.0
    %194 = vmatpush2.msra.mxu0 0.0
    %195 = vmatprep.subr.mxu0 0.0
    %196 = vmatpush2.msra.mxu0 0.0
    %197 = vmatprep.subr.mxu0 0.0
    %198 = vmatpush2.msra.mxu0 0.0
    %199 = vmatprep.subr.mxu0 0.0
    %200 = vmatpush2.msra.mxu0 0.0
    %201 = vmatprep.subr.mxu0 0.0
    %202 = vmatpush2.msra.mxu0 0.0
    %203 = vmatprep.subr.mxu0 0.0
    %204 = vmatpush2.msra.mxu0 0.0
    %205 = vmatprep.subr.mxu0 0.0
    %206 = vmatpush2.msra.mxu0 0.0
    %207 = vmatprep.subr.mxu0 0.0
    %208 = vmatpush2.msra.mxu0 0.0
    %209 = vmatprep.subr.mxu0 0.0
    %210 = vmatpush2.msra.mxu0 0.0
    %211 = vmatprep.subr.mxu0 0.0
    %212 = vmatpush2.msra.mxu0 0.0
    %213 = vmatprep.subr.mxu0 0.0
    %214 = vmatpush2.msra.mxu0 0.0
    %215 = vmatprep.subr.mxu0 0.0
    %216 = vmatpush2.msra.mxu0 0.0
    %217 = vmatprep.subr.mxu0 0.0
    %218 = vmatpush2.msra.mxu0 0.0
    %219 = vmatprep.mubr.f32.mxu0 0.0
    %220 = vmatmul.mubr.f32.gmra.mxu0 %v150
    %v221 = vpop.f32.mrf.mxu0
    %v222 = vadd.f32 %v154, %v221
    %v223 = vpop.f32.mrf.mxu0
    %224 = vdwg.mxu0
    %v225 = vmax.f32 %v222, 0.0
    %v226 = vlaneseq
    %v227 = vshrl.u32 %v226, 7
    %v228 = vsub.s32 2, %v227
    %v229 = vrot.slane %v71, %v228
    %230 = vmatprep.subr.mxu0 0.0
    %231 = vmatpush1.msra.mxu0 %v70
    %232 = vmatprep.subr.mxu0 0.0
    %233 = vmatpush1.msra.mxu0 %v69
    %234 = vmatprep.subr.mxu0 0.0
    %235 = vmatpush1.msra.mxu0 %v68
    %236 = vmatprep.subr.mxu0 0.0
    %237 = vmatpush1.msra.mxu0 %v67
    %238 = vmatprep.subr.mxu0 0.0
    %239 = vmatpush1.msra.mxu0 %v66
    %240 = vmatprep.subr.mxu0 0.0
    %241 = vmatpush1.msra.mxu0 %v65
    %242 = vmatprep.subr.mxu0 0.0
    %243 = vmatpush1.msra.mxu0 %v64
    %244 = vmatprep.subr.mxu0 0.0
    %245 = vmatpush1.msra.mxu0 %v63
    %246 = vmatprep.subr.mxu0 0.0
    %247 = vmatpush1.msra.mxu0 %v62
    %248 = vmatprep.subr.mxu0 0.0
    %249 = vmatpush1.msra.mxu0 %v61
    %250 = vmatprep.subr.mxu0 0.0
    %251 = vmatpush1.msra.mxu0 %v60
    %252 = vmatprep.subr.mxu0 0.0
    %253 = vmatpush1.msra.mxu0 %v59
    %254 = vmatprep.subr.mxu0 0.0
    %255 = vmatpush1.msra.mxu0 %v58
    %256 = vmatprep.subr.mxu0 0.0
    %257 = vmatpush1.msra.mxu0 %v57
    %258 = vmatprep.subr.mxu0 0.0
    %259 = vmatpush1.msra.mxu0 %v56
    %260 = vmatprep.subr.mxu0 0.0
    %261 = vmatpush1.msra.mxu0 %v55
    %262 = vmatprep.subr.mxu0 0.0
    %263 = vmatpush2.msra.mxu0 0.0
    %264 = vmatprep.subr.mxu0 0.0
    %265 = vmatpush2.msra.mxu0 0.0
    %266 = vmatprep.subr.mxu0 0.0
    %267 = vmatpush2.msra.mxu0 0.0
    %268 = vmatprep.subr.mxu0 0.0
    %269 = vmatpush2.msra.mxu0 0.0
    %270 = vmatprep.subr.mxu0 0.0
    %271 = vmatpush2.msra.mxu0 0.0
    %272 = vmatprep.subr.mxu0 0.0
    %273 = vmatpush2.msra.mxu0 0.0
    %274 = vmatprep.subr.mxu0 0.0
    %275 = vmatpush2.msra.mxu0 0.0
    %276 = vmatprep.subr.mxu0 0.0
    %277 = vmatpush2.msra.mxu0 0.0
    %278 = vmatprep.subr.mxu0 0.0
    %279 = vmatpush2.msra.mxu0 0.0
    %280 = vmatprep.subr.mxu0 0.0
    %281 = vmatpush2.msra.mxu0 0.0
    %282 = vmatprep.subr.mxu0 0.0
    %283 = vmatpush2.msra.mxu0 0.0
    %284 = vmatprep.subr.mxu0 0.0
    %285 = vmatpush2.msra.mxu0 0.0
    %286 = vmatprep.subr.mxu0 0.0
    %287 = vmatpush2.msra.mxu0 0.0
    %288 = vmatprep.subr.mxu0 0.0
    %289 = vmatpush2.msra.mxu0 0.0
    %290 = vmatprep.subr.mxu0 0.0
    %291 = vmatpush2.msra.mxu0 0.0
    %292 = vmatprep.subr.mxu0 0.0
    %293 = vmatpush2.msra.mxu0 0.0
    %294 = vmatprep.mubr.f32.mxu0 0.0
    %295 = vmatmul.mubr.f32.gmra.mxu0 %v225
    %v296 = vpop.f32.mrf.mxu0
    %v297 = vadd.f32 %v229, %v296
    %v298 = vpop.f32.mrf.mxu0
    %299 = vdwg.mxu0
    %300 = vst [vmem:[%s2] sm:$0xff] %v297
    // Predicated region
    $region18: #{policy_forward.1} parent=1 // pred_check
      _
    $region19: #{policy_forward.1} parent=1 // pred_check_branch
      %302 = sbr.rel (0) target = $region21
    $region20: #{policy_forward.1} parent=1 // pred_region
      _
    $region21: #{policy_forward.1} parent=1 // pred_fallthru
      _
    // Predicated region
    $region22: #{policy_forward.1} parent=1 // pred_check
      _
    $region23: #{policy_forward.1} parent=1 // pred_check_branch
      %304 = sbr.rel (0) target = $region25
    $region24: #{policy_forward.1} parent=1 // pred_region
      _
    $region25: #{policy_forward.1} parent=1 // pred_fallthru
      _
    %305 = vsyncpa [#allocation3], 1
    %306 = vsyncpa [#allocation5], 1

</llo_original>
